<compile_context>
chip_gen: v6e
topology: v6e:2x2x1
jax: 0.10.0
libtpu: 0.0.40
codegen_flags: <defaults>
</compile_context>

<pallas_src>
import functools

import numpy as np
import jax
import jax.numpy as jnp
from jax import lax
from jax.experimental import pallas as pl
from jax.experimental.pallas import tpu as pltpu

BN_EPS = 1e-5
VMEM_LIMIT = 32 * 1024 * 1024


def _choose_t_tile(T):
    # Largest multiple-of-8 divisor of T, capped so per-step blocks stay small while
    # amortizing the ~0.35us/grid-step overhead.
    # TODO(synk): support T not divisible by 8 (ragged tail tile + masked BN stats).
    assert T % 8 == 0, "this implementation tiles time in multiples of 8 sublanes"
    for tt in (256, 128, 64, 32, 16, 8):
        if T % tt == 0:
            return tt
    return 8  # unreachable


# ----------------------------------------------------------------------------- kernels
def conv3x3_stats_kernel(x_ref, xp_ref, xn_ref, w_ref, b_ref, sc_ref, sh_ref,
                         y_ref, s_ref, *, act_input):
    """One (n, t-tile) step of: [fused BN+ReLU of previous layer] -> 3x3 'same' conv.

    x_ref : (1, Tt, Lin)   current tile, lane packing [w*Cin + cin]
    xp_ref: (1, 8,  Lin)   8-row block containing the row just above the tile
    xn_ref: (1, 8,  Lin)   8-row block containing the row just below the tile
    w_ref : (3*Lin, Lout)  banded conv weight (kh-major), Lout = n_mels*Cout
    b_ref : (1, Lout)      conv bias broadcast over mel bins
    sc_ref, sh_ref: (1, Lin)  fused BN scale/shift of the *input* layer
    y_ref : (1, Tt, Lout)  pre-BN conv output (+bias)
    s_ref : (1, 1, 2, Lout) per-tile [sum, sum_sq] partials for this layer's BN stats
    """
    x = x_ref[0].astype(jnp.float32)                 # (Tt, Lin)
    prev = xp_ref[0, 7:8, :].astype(jnp.float32)     # row t_tile_start - 1
    nxt = xn_ref[0, 0:1, :].astype(jnp.float32)      # row t_tile_end

    if act_input:                                    # fused BN + ReLU of previous layer
        sc = sc_ref[...]
        sh = sh_ref[...]
        x = jnp.maximum(x * sc + sh, 0.0)
        prev = jnp.maximum(prev * sc + sh, 0.0)
        nxt = jnp.maximum(nxt * sc + sh, 0.0)

    # Zero halo at the time boundaries == the conv's spatial zero padding in H
    # (applied *after* the fused activation, matching the reference).
    t = pl.program_id(1)
    prev = prev * (t > 0).astype(jnp.float32)
    nxt = nxt * (t < pl.num_programs(1) - 1).astype(jnp.float32)

    # im2col over the 3 time taps -> one MXU contraction with K = 3*Lin.
    x_m1 = jnp.concatenate([prev, x[:-1, :]], axis=0)    # rows t-1
    x_p1 = jnp.concatenate([x[1:, :], nxt], axis=0)      # rows t+1
    patch = jnp.concatenate([x_m1, x, x_p1], axis=-1)    # (Tt, 3*Lin)
    y = jnp.dot(patch, w_ref[...], preferred_element_type=jnp.float32) + b_ref[...]

    y_ref[0] = y.astype(y_ref.dtype)
    # Per-tile BN partials (single pass: sum and sum of squares, f32).
    s_ref[0, 0, 0:1, :] = jnp.sum(y, axis=0, keepdims=True)
    s_ref[0, 0, 1:2, :] = jnp.sum(y * y, axis=0, keepdims=True)


def bn_relu_linear_kernel(x_ref, w_ref, b_ref, sc_ref, sh_ref, o_ref):
    """Fused BN+ReLU of the last conv layer + Linear (weight pre-permuted to lane order)."""
    x = jnp.maximum(x_ref[0].astype(jnp.float32) * sc_ref[...] + sh_ref[...], 0.0)
    o_ref[0] = (jnp.dot(x, w_ref[...], preferred_element_type=jnp.float32)
                + b_ref[...]).astype(o_ref.dtype)


# ----------------------------------------------------------------------------- wrappers
def conv3x3_bn_stats(x, w_band, b_lane, scale, shift, n_mels, cout, *, act_input):
    """x: (N, T, Lin) -> (pre-BN conv output (N, T, Lout), stats (N, nT, 2, Lout))."""
    N, T, Lin = x.shape
    Lout = n_mels * cout
    Tt = _choose_t_tile(T)
    nT = T // Tt
    tb = Tt // 8          # T-tile size in units of 8-row halo blocks
    nb8 = T // 8          # number of 8-row blocks along T

    kernel = functools.partial(conv3x3_stats_kernel, act_input=act_input)
    flops = 2 * N * T * Lout * (3 * Lin)
    bytes_accessed = 4 * (x.size + N * T * Lout + w_band.size + N * nT * 2 * Lout)

    y, stats = pl.pallas_call(
        kernel,
        out_shape=(jax.ShapeDtypeStruct((N, T, Lout), jnp.float32),
                   jax.ShapeDtypeStruct((N, nT, 2, Lout), jnp.float32)),
        grid=(N, nT),
        in_specs=[
            # current tile
            pl.BlockSpec((1, Tt, Lin), lambda n, t: (n, t, 0)),
            # 8-row block holding the halo row above (clamped, masked in-kernel at t==0)
            pl.BlockSpec((1, 8, Lin),
                         lambda n, t: (n, jnp.maximum(t * tb - 1, 0), 0)),
            # 8-row block holding the halo row below (clamped, masked at t==last)
            pl.BlockSpec((1, 8, Lin),
                         lambda n, t: (n, jnp.minimum((t + 1) * tb, nb8 - 1), 0)),
            # banded conv weight / bias / fused-BN affine: resident across the grid
            pl.BlockSpec((3 * Lin, Lout), lambda n, t: (0, 0)),
            pl.BlockSpec((1, Lout), lambda n, t: (0, 0)),
            pl.BlockSpec((1, Lin), lambda n, t: (0, 0)),
            pl.BlockSpec((1, Lin), lambda n, t: (0, 0)),
        ],
        out_specs=(
            pl.BlockSpec((1, Tt, Lout), lambda n, t: (n, t, 0)),
            pl.BlockSpec((1, 1, 2, Lout), lambda n, t: (n, t, 0, 0)),
        ),
        compiler_params=pltpu.CompilerParams(
            dimension_semantics=("parallel", "parallel"),
            vmem_limit_bytes=VMEM_LIMIT),
        cost_estimate=pl.CostEstimate(flops=flops, transcendentals=0,
                                      bytes_accessed=bytes_accessed),
    )(x, x, x, w_band, b_lane, scale, shift)
    return y, stats


def bn_relu_linear(x, w, b, scale, shift):
    """x: (N, T, D) pre-BN last-conv activation -> (N, T, G)."""
    N, T, D = x.shape
    G = w.shape[1]
    Tt = _choose_t_tile(T)
    nT = T // Tt
    flops = 2 * N * T * D * G
    bytes_accessed = 4 * (x.size + N * T * G + w.size)

    return pl.pallas_call(
        bn_relu_linear_kernel,
        out_shape=jax.ShapeDtypeStruct((N, T, G), jnp.float32),
        grid=(N, nT),
        in_specs=[
            pl.BlockSpec((1, Tt, D), lambda n, t: (n, t, 0)),
            pl.BlockSpec((D, G), lambda n, t: (0, 0)),
            pl.BlockSpec((1, G), lambda n, t: (0, 0)),
            pl.BlockSpec((1, D), lambda n, t: (0, 0)),
            pl.BlockSpec((1, D), lambda n, t: (0, 0)),
        ],
        out_specs=pl.BlockSpec((1, Tt, G), lambda n, t: (n, t, 0)),
        compiler_params=pltpu.CompilerParams(
            dimension_semantics=("parallel", "parallel"),
            vmem_limit_bytes=VMEM_LIMIT),
        cost_estimate=pl.CostEstimate(flops=flops, transcendentals=0,
                                      bytes_accessed=bytes_accessed),
    )(x, w, b, scale, shift)


def _bn_affine_from_stats(stats, gamma, beta, n_mels, cout, count):
    """Per-tile (sum, sum_sq) partials -> per-lane BN scale/shift (tiny O(C) JAX work)."""
    s = stats.sum(axis=(0, 1))                        # (2, n_mels*cout)
    s = s.reshape(2, n_mels, cout).sum(axis=1)        # (2, cout)
    mean = s[0] / count
    var = jnp.maximum(s[1] / count - mean * mean, 0.0)   # biased variance (training BN)
    scale = gamma * lax.rsqrt(var + BN_EPS)
    shift = beta - mean * scale
    # broadcast per-channel affine to the lane packing [w*C + c]
    return jnp.tile(scale, n_mels)[None, :], jnp.tile(shift, n_mels)[None, :]


# ----------------------------------------------------------------------------- params
def init_params(seed, n_mels, ref_enc_filters, gru_size):
    key = jax.random.PRNGKey(seed)
    filters = [1] + list(ref_enc_filters)
    layers = []
    for cin, cout in zip(filters[:-1], filters[1:]):
        key, k1, k2, k3, k4 = jax.random.split(key, 5)
        w_oihw = jax.random.normal(k1, (cout, cin, 3, 3), jnp.float32) / np.sqrt(cin * 9)
        bias = 0.1 * jax.random.normal(k2, (cout,), jnp.float32)
        gamma = 1.0 + 0.1 * jax.random.normal(k3, (cout,), jnp.float32)
        beta = 0.1 * jax.random.normal(k4, (cout,), jnp.float32)

        # Banded lane-space conv matrix: width taps (kw) + cin->cout mixing folded into a
        # single (3*n_mels*cin, n_mels*cout) matrix; the zero bands implement the width
        # zero-padding.  Row block dh*Lin + w_in*cin + ci, col w_out*cout + co.
        lin, lout = n_mels * cin, n_mels * cout
        w_np = np.asarray(w_oihw)
        m = np.zeros((3 * lin, lout), np.float32)
        for dh in range(3):
            for w_out in range(n_mels):
                for dw in range(3):
                    w_in = w_out + dw - 1
                    if 0 <= w_in < n_mels:
                        m[dh * lin + w_in * cin: dh * lin + (w_in + 1) * cin,
                          w_out * cout: (w_out + 1) * cout] = w_np[:, :, dh, dw].T
        layers.append(dict(
            # PyTorch-layout params (used by the pure-JAX reference)
            w_oihw=w_oihw, bias=bias, gamma=gamma, beta=beta, cout=cout,
            # kernel-layout params
            w_band=jnp.asarray(m),
            b_lane=jnp.tile(bias, n_mels)[None, :],
        ))

    d_in = ref_enc_filters[-1] * n_mels  # calculate_channels keeps n_mels (stride 1, pad 1)
    key, k1, k2 = jax.random.split(key, 3)
    w_lin = jax.random.normal(k1, (d_in, gru_size), jnp.float32) / np.sqrt(d_in)
    b_lin = 0.1 * jax.random.normal(k2, (gru_size,), jnp.float32)

    # Pre-permute the Linear weight rows so the kernel's (w*C + c) lane packing feeds it
    # directly (PyTorch flattens features as c*n_mels + w).  Free at runtime.
    c_last = ref_enc_filters[-1]
    perm = (np.arange(c_last)[None, :] * n_mels + np.arange(n_mels)[:, None]).reshape(-1)
    w_lin_perm = w_lin[jnp.asarray(perm), :]
    return layers, w_lin, b_lin, w_lin_perm


# ----------------------------------------------------------------------------- forward
def reference_encoder_pallas(x, layers, w_lin_perm, b_lin, n_mels, gru_size):
    """x: (N, n_mel_channels, T), exactly the PyTorch module's input layout."""
    N, _, T = x.shape
    # inputs.transpose(1,2).view(N, 1, T, n_mels) -> lane-dense (N, T, n_mels*1)
    h = jnp.transpose(x, (0, 2, 1))
    count = float(N * T * n_mels)          # BatchNorm2d reduces over (N, H, W)

    scale = jnp.ones((1, h.shape[-1]), jnp.float32)
    shift = jnp.zeros((1, h.shape[-1]), jnp.float32)
    act_input = False                      # layer 1 sees the raw mel (no BN/ReLU fused in)
    for lyr in layers:
        h, stats = conv3x3_bn_stats(h, lyr["w_band"], lyr["b_lane"], scale, shift,
                                    n_mels, lyr["cout"], act_input=act_input)
        scale, shift = _bn_affine_from_stats(stats, lyr["gamma"], lyr["beta"],
                                             n_mels, lyr["cout"], count)
        act_input = True

    # Last layer's BN+ReLU is fused into the Linear kernel (weight already lane-permuted).
    out = bn_relu_linear(h, w_lin_perm, b_lin[None, :], scale, shift)
    return out  # (N, T, gru_size)


def reference_encoder_jax_ref(x, layers, w_lin, b_lin, n_mels):
    """Pure-JAX reference mirroring the PyTorch forward (NCHW), for verification."""
    N, _, T = x.shape
    h = jnp.transpose(x, (0, 2, 1)).reshape(N, 1, T, n_mels)
    for lyr in layers:
        h = lax.conv_general_dilated(h, lyr["w_oihw"], (1, 1), ((1, 1), (1, 1)),
                                     dimension_numbers=("NCHW", "OIHW", "NCHW"))
        h = h + lyr["bias"][None, :, None, None]
        mean = jnp.mean(h, axis=(0, 2, 3), keepdims=True)
        var = jnp.mean((h - mean) ** 2, axis=(0, 2, 3), keepdims=True)
        h = (h - mean) / jnp.sqrt(var + BN_EPS)
        h = h * lyr["gamma"][None, :, None, None] + lyr["beta"][None, :, None, None]
        h = jnp.maximum(h, 0.0)
    h = jnp.transpose(h, (0, 2, 1, 3)).reshape(N, T, -1)
    return h @ w_lin + b_lin[None, None, :]


# ----------------------------------------------------------------------------- main
if __name__ == "__main__":
    # hp: n_mel_channels=16, ref_enc_filters=[4, 8], ref_enc_gru_size=32
    N, n_mels, T = 2, 16, 8
    ref_enc_filters = [4, 8]
    gru_size = 32

    layers, w_lin, b_lin, w_lin_perm = init_params(0, n_mels, ref_enc_filters, gru_size)
    x = jax.random.normal(jax.random.PRNGKey(0), (N, n_mels, T), jnp.float32)

    out = reference_encoder_pallas(x, layers, w_lin_perm, b_lin, n_mels, gru_size)
    out = jax.block_until_ready(out)
    assert out.shape == (N, T, gru_size)

    ref = reference_encoder_jax_ref(x, layers, w_lin, b_lin, n_mels)
    np.testing.assert_allclose(np.asarray(out), np.asarray(ref), rtol=2e-3, atol=2e-3)

    print("KERNEL_OK")
</pallas_src>

<mosaic_0001>
module attributes {stable_mosaic.version = 11 : i64} {
  func.func @conv3x3_stats_kernel(%arg0: i32, %arg1: i32, %arg2: memref<1x8x16xf32, #tpu.memory_space<vmem>>, %arg3: memref<1x8x16xf32, #tpu.memory_space<vmem>>, %arg4: memref<1x8x16xf32, #tpu.memory_space<vmem>>, %arg5: memref<48x64xf32, #tpu.memory_space<vmem>>, %arg6: memref<1x64xf32, #tpu.memory_space<vmem>>, %arg7: memref<1x16xf32, #tpu.memory_space<vmem>>, %arg8: memref<1x16xf32, #tpu.memory_space<vmem>>, %arg9: memref<1x8x64xf32, #tpu.memory_space<vmem>>, %arg10: memref<1x1x2x64xf32, #tpu.memory_space<vmem>>) attributes {dimension_semantics = [#tpu.dimension_semantics<parallel>, #tpu.dimension_semantics<parallel>], iteration_bounds = array<i64: 2, 1>, scalar_prefetch = 0 : i64, scratch_operands = 0 : i64, tpu.core_type = #tpu.core_type<tc>, window_params = [{transform_indices = @transform_0, window_bounds = array<i64: 1, 8, 16>}, {transform_indices = @transform_1, window_bounds = array<i64: 1, 8, 16>}, {transform_indices = @transform_2, window_bounds = array<i64: 1, 8, 16>}, {pipeline_mode = #tpu.pipeline_mode<synchronous>, transform_indices = @transform_3, window_bounds = array<i64: 48, 64>}, {pipeline_mode = #tpu.pipeline_mode<synchronous>, transform_indices = @transform_4, window_bounds = array<i64: 1, 64>}, {pipeline_mode = #tpu.pipeline_mode<synchronous>, transform_indices = @transform_5, window_bounds = array<i64: 1, 16>}, {pipeline_mode = #tpu.pipeline_mode<synchronous>, transform_indices = @transform_6, window_bounds = array<i64: 1, 16>}, {transform_indices = @transform_7, window_bounds = array<i64: 1, 8, 64>}, {transform_indices = @transform_8, window_bounds = array<i64: 1, 1, 2, 64>}]} {
    %c0 = arith.constant 0 : index
    %c0_0 = arith.constant 0 : index
    %c0_1 = arith.constant 0 : index
    %0 = vector.load %arg2[%c0, %c0_0, %c0_1] : memref<1x8x16xf32, #tpu.memory_space<vmem>>, vector<1x8x16xf32>
    %1 = vector.shape_cast %0 : vector<1x8x16xf32> to vector<8x16xf32>
    %c0_2 = arith.constant 0 : index
    %c7 = arith.constant 7 : index
    %c0_3 = arith.constant 0 : index
    %2 = vector.load %arg3[%c0_2, %c7, %c0_3] : memref<1x8x16xf32, #tpu.memory_space<vmem>>, vector<1x1x16xf32>
    %3 = vector.shape_cast %2 : vector<1x1x16xf32> to vector<1x16xf32>
    %c0_4 = arith.constant 0 : index
    %c0_5 = arith.constant 0 : index
    %c0_6 = arith.constant 0 : index
    %4 = vector.load %arg4[%c0_4, %c0_5, %c0_6] : memref<1x8x16xf32, #tpu.memory_space<vmem>>, vector<1x1x16xf32>
    %5 = vector.shape_cast %4 : vector<1x1x16xf32> to vector<1x16xf32>
    %c0_i32 = arith.constant 0 : i32
    %6 = arith.cmpi sgt, %arg1, %c0_i32 : i32
    %7 = arith.extui %6 : i1 to i32
    %8 = arith.sitofp %7 : i32 to f32
    %9 = vector.broadcast %8 : f32 to vector<1x16xf32>
    %10 = arith.mulf %3, %9 : vector<1x16xf32>
    %c0_i32_7 = arith.constant 0 : i32
    %11 = arith.cmpi slt, %arg1, %c0_i32_7 : i32
    %12 = arith.extui %11 : i1 to i32
    %13 = arith.sitofp %12 : i32 to f32
    %14 = vector.broadcast %13 : f32 to vector<1x16xf32>
    %15 = arith.mulf %5, %14 : vector<1x16xf32>
    %16 = vector.extract_strided_slice %1 {offsets = [0, 0], sizes = [7, 16], strides = [1, 1]} : vector<8x16xf32> to vector<7x16xf32>
    %17 = tpu.concatenate %10, %16 in 0 : vector<1x16xf32>, vector<7x16xf32> -> vector<8x16xf32>
    %18 = vector.extract_strided_slice %1 {offsets = [1, 0], sizes = [7, 16], strides = [1, 1]} : vector<8x16xf32> to vector<7x16xf32>
    %19 = tpu.concatenate %18, %15 in 0 : vector<7x16xf32>, vector<1x16xf32> -> vector<8x16xf32>
    %20 = tpu.concatenate %17, %1, %19 in 1 : vector<8x16xf32>, vector<8x16xf32>, vector<8x16xf32> -> vector<8x48xf32>
    %c0_8 = arith.constant 0 : index
    %c0_9 = arith.constant 0 : index
    %21 = vector.load %arg5[%c0_8, %c0_9] : memref<48x64xf32, #tpu.memory_space<vmem>>, vector<48x64xf32>
    %cst = arith.constant dense<0.000000e+00> : vector<8x64xf32>
    %22 = tpu.matmul %20, %21, %cst {dimension_numbers = #tpu.dot_dimension_numbers<[1], [0], [0], [1], [0, 0, 1, 1], [], []>} : vector<8x48xf32>, vector<48x64xf32>, vector<8x64xf32> -> vector<8x64xf32>
    %c0_10 = arith.constant 0 : index
    %c0_11 = arith.constant 0 : index
    %23 = vector.load %arg6[%c0_10, %c0_11] : memref<1x64xf32, #tpu.memory_space<vmem>>, vector<1x64xf32>
    %24 = vector.broadcast %23 : vector<1x64xf32> to vector<8x64xf32>
    %25 = arith.addf %22, %24 : vector<8x64xf32>
    %c0_12 = arith.constant 0 : index
    %c0_13 = arith.constant 0 : index
    %c0_14 = arith.constant 0 : index
    %26 = vector.load %arg9[%c0_12, %c0_13, %c0_14] : memref<1x8x64xf32, #tpu.memory_space<vmem>>, vector<1x8x64xf32>
    %27 = vector.shape_cast %26 : vector<1x8x64xf32> to vector<8x64xf32>
    %28 = vector.shape_cast %25 : vector<8x64xf32> to vector<1x8x64xf32>
    tpu.vector_store %arg9[%c0_12, %c0_13, %c0_14], %28 {strides = array<i32>} : memref<1x8x64xf32, #tpu.memory_space<vmem>>, vector<1x8x64xf32>,
    %cst_15 = arith.constant dense<0.000000e+00> : vector<64xf32>
    %29 = vector.multi_reduction <add>, %25, %cst_15 [0] : vector<8x64xf32> to vector<64xf32>
    %30 = vector.shape_cast %29 : vector<64xf32> to vector<1x64xf32>
    %c0_16 = arith.constant 0 : index
    %c0_17 = arith.constant 0 : index
    %c0_18 = arith.constant 0 : index
    %c0_19 = arith.constant 0 : index
    %31 = vector.load %arg10[%c0_16, %c0_17, %c0_18, %c0_19] : memref<1x1x2x64xf32, #tpu.memory_space<vmem>>, vector<1x1x1x64xf32>
    %32 = vector.shape_cast %31 : vector<1x1x1x64xf32> to vector<1x64xf32>
    %33 = vector.shape_cast %30 : vector<1x64xf32> to vector<1x1x1x64xf32>
    tpu.vector_store %arg10[%c0_16, %c0_17, %c0_18, %c0_19], %33 {strides = array<i32>} : memref<1x1x2x64xf32, #tpu.memory_space<vmem>>, vector<1x1x1x64xf32>,
    %34 = arith.mulf %25, %25 : vector<8x64xf32>
    %cst_20 = arith.constant dense<0.000000e+00> : vector<64xf32>
    %35 = vector.multi_reduction <add>, %34, %cst_20 [0] : vector<8x64xf32> to vector<64xf32>
    %36 = vector.shape_cast %35 : vector<64xf32> to vector<1x64xf32>
    %c0_21 = arith.constant 0 : index
    %c0_22 = arith.constant 0 : index
    %c1 = arith.constant 1 : index
    %c0_23 = arith.constant 0 : index
    %37 = vector.load %arg10[%c0_21, %c0_22, %c1, %c0_23] : memref<1x1x2x64xf32, #tpu.memory_space<vmem>>, vector<1x1x1x64xf32>
    %38 = vector.shape_cast %37 : vector<1x1x1x64xf32> to vector<1x64xf32>
    %39 = vector.shape_cast %36 : vector<1x64xf32> to vector<1x1x1x64xf32>
    tpu.vector_store %arg10[%c0_21, %c0_22, %c1, %c0_23], %39 {strides = array<i32>} : memref<1x1x2x64xf32, #tpu.memory_space<vmem>>, vector<1x1x1x64xf32>,
    return
  }
  func.func @transform_0(%arg0: i32, %arg1: i32) -> (i32, i32, i32) {
    %c0_i32 = arith.constant 0 : i32
    %c0_i32_0 = arith.constant 0 : i32
    return %arg0, %arg1, %c0_i32 : i32, i32, i32
  }
  func.func @transform_1(%arg0: i32, %arg1: i32) -> (i32, i32, i32) {
    %c1_i32 = arith.constant 1 : i32
    %0 = arith.muli %arg1, %c1_i32 : i32
    %c1_i32_0 = arith.constant 1 : i32
    %1 = arith.subi %0, %c1_i32_0 : i32
    %c0_i32 = arith.constant 0 : i32
    %2 = arith.maxsi %1, %c0_i32 : i32
    %c0_i32_1 = arith.constant 0 : i32
    %c0_i32_2 = arith.constant 0 : i32
    return %arg0, %2, %c0_i32_1 : i32, i32, i32
  }
  func.func @transform_2(%arg0: i32, %arg1: i32) -> (i32, i32, i32) {
    %c1_i32 = arith.constant 1 : i32
    %0 = arith.addi %arg1, %c1_i32 : i32
    %c1_i32_0 = arith.constant 1 : i32
    %1 = arith.muli %0, %c1_i32_0 : i32
    %c0_i32 = arith.constant 0 : i32
    %2 = arith.minsi %1, %c0_i32 : i32
    %c0_i32_1 = arith.constant 0 : i32
    %c0_i32_2 = arith.constant 0 : i32
    return %arg0, %2, %c0_i32_1 : i32, i32, i32
  }
  func.func @transform_3(%arg0: i32, %arg1: i32) -> (i32, i32) {
    %c0_i32 = arith.constant 0 : i32
    %c0_i32_0 = arith.constant 0 : i32
    %c0_i32_1 = arith.constant 0 : i32
    return %c0_i32, %c0_i32_0 : i32, i32
  }
  func.func @transform_4(%arg0: i32, %arg1: i32) -> (i32, i32) {
    %c0_i32 = arith.constant 0 : i32
    %c0_i32_0 = arith.constant 0 : i32
    %c0_i32_1 = arith.constant 0 : i32
    return %c0_i32, %c0_i32_0 : i32, i32
  }
  func.func @transform_5(%arg0: i32, %arg1: i32) -> (i32, i32) {
    %c0_i32 = arith.constant 0 : i32
    %c0_i32_0 = arith.constant 0 : i32
    %c0_i32_1 = arith.constant 0 : i32
    return %c0_i32, %c0_i32_0 : i32, i32
  }
  func.func @transform_6(%arg0: i32, %arg1: i32) -> (i32, i32) {
    %c0_i32 = arith.constant 0 : i32
    %c0_i32_0 = arith.constant 0 : i32
    %c0_i32_1 = arith.constant 0 : i32
    return %c0_i32, %c0_i32_0 : i32, i32
  }
  func.func @transform_7(%arg0: i32, %arg1: i32) -> (i32, i32, i32) {
    %c0_i32 = arith.constant 0 : i32
    %c0_i32_0 = arith.constant 0 : i32
    return %arg0, %arg1, %c0_i32 : i32, i32, i32
  }
  func.func @transform_8(%arg0: i32, %arg1: i32) -> (i32, i32, i32, i32) {
    %c0_i32 = arith.constant 0 : i32
    %c0_i32_0 = arith.constant 0 : i32
    %c0_i32_1 = arith.constant 0 : i32
    return %arg0, %arg1, %c0_i32, %c0_i32_0 : i32, i32, i32, i32
  }
}

</mosaic_0001>

<llo_original>
// kernel: tpu_custom_call.1
$region0: #{tpu_custom_call.1}
  #allocation0 [shape = 'u32[]', space=smem, size = 0x4, offset = 0x4, fixed_abs, tag = 'smem constant byte address 0x4 - core index']
  #allocation1 [shape = 'u32[144,128]{1,0:T(1,128)}', space=vmem, size = 0x12000, scoped, tag = 'internal scratch']
  %s0 = inlined_call_operand.hbm [shape: f32[2,8,16], index: 0, kind: input, shape index: {}]
  %s1 = inlined_call_operand.hbm [shape: f32[2,8,16], index: 1, kind: input, shape index: {}]
  %s2 = inlined_call_operand.hbm [shape: f32[2,8,16], index: 2, kind: input, shape index: {}]
  %s3 = inlined_call_operand.hbm [shape: f32[48,64], index: 3, kind: input, shape index: {}]
  %s4 = inlined_call_operand.vmem [shape: f32[1,64], index: 4, kind: input, shape index: {}]
  %s5 = inlined_call_operand.vmem [shape: f32[1,16], index: 5, kind: input, shape index: {}]
  %s6 = inlined_call_operand.vmem [shape: f32[1,16], index: 6, kind: input, shape index: {}]
  %s7 = inlined_call_operand.hbm [shape: f32[2,8,64], index: 7, kind: output, shape index: {0}]
  %s8 = inlined_call_operand.hbm [shape: f32[2,1,2,64], index: 8, kind: output, shape index: {1}]
  %9 = xla_tuple %s7, %s8
  %s10 = sld [smem:[#allocation0]]
  $region85: #{tpu_custom_call.1} parent=0
    _
  %s12 = ssub.s32 1, %s10
  %s13 = scalar_select 0, %s12, %s10
  $region1: #{tpu_custom_call.1} parent=0
    #allocation2 [shape = 'u8[8192]{0}', space=vmem, size = 0x2000, scoped, tag = 'input window, operand 0']
    #allocation3 [shape = 's32[2]{0}', space=sflag, size = 0x8, scoped, tag = 'scoped memory for tpu_custom_call.1']
    #allocation4 [shape = 's32[2]{0}', space=sflag, size = 0x8, scoped, tag = 'scoped memory for tpu_custom_call.1']
    #allocation5 [shape = 'u8[8192]{0}', space=vmem, size = 0x2000, scoped, tag = 'input window, operand 1']
    #allocation6 [shape = 's32[2]{0}', space=sflag, size = 0x8, scoped, tag = 'scoped memory for tpu_custom_call.1']
    #allocation7 [shape = 'u8[8192]{0}', space=vmem, size = 0x2000, scoped, tag = 'input window, operand 2']
    #allocation8 [shape = 'u8[24576]{0}', space=vmem, size = 0x6000, scoped, tag = 'input window, operand 3, single buffered']
    #allocation9 [shape = 's32[1]{0}', space=sflag, size = 0x4, scoped, tag = 'scoped memory for tpu_custom_call.1']
    #allocation10 [shape = 'u8[8192]{0}', space=vmem, size = 0x2000, scoped, tag = 'output window, operand 0']
    #allocation11 [shape = 'u8[2048]{0}', space=vmem, size = 0x800, scoped, tag = 'output window, operand 1']
    #allocation12 [shape = 's32[2]{0}', space=sflag, size = 0x8, scoped, tag = 'scoped memory for tpu_custom_call.1']
    %14 = vsyncpa [#allocation3], 0
    %s15 = scalar_lea.sflag [#allocation3], 1
    %16 = vsyncpa %s15, 0
    %17 = vsyncpa [#allocation6], 0
    %s18 = scalar_lea.sflag [#allocation6], 1
    %19 = vsyncpa %s18, 0
    %20 = vsyncpa [#allocation9], 0
    %21 = vsyncpa [#allocation4], 0
    %s22 = scalar_lea.sflag [#allocation4], 1
    %23 = vsyncpa %s22, 0
    %24 = vsyncpa [#allocation12], 0
    %s25 = scalar_lea.sflag [#allocation12], 1
    %26 = vsyncpa %s25, 0
    loop: start=0, step=1, limit=4
    $region2: #{tpu_custom_call.1} parent=1 // loop_pre_header
      _
    $region3: #{tpu_custom_call.1} parent=1 // loop_header
      %s28 = sphi 0, %s32
      %p29 = scmp.ge.s32.totalorder %s28, 4
      %s35 = sphi 0, %s47
      %s36 = sphi 0, %s43
      %s37 = sphi 0, %s35
      %s38 = sphi 0, %s36
      %s39 = sphi 0, %s37
      %s40 = sphi 0, %s38
      %s52 = sphi 0, %s54
      %s55 = sphi 0, %s52
      %s56 = sphi 0, %s55
      %s72 = sphi 0, %s56
      %s86 = sphi 0, %s88
      %s89 = sphi 0, %s86
      %s90 = sphi 0, %s89
      %s106 = sphi 0, %s90
      %s120 = sphi 0, %s122
      %s123 = sphi 0, %s120
      %s124 = sphi 0, %s123
      %s140 = sphi 0, %s124
      %s144 = sphi 0, %s144
      %s146 = sphi 0, %s144
      %s147 = sphi 0, %s146
      %s161 = sphi 0, %s147
      %s165 = sphi 0, %s165
      %s167 = sphi 0, %s165
      %s168 = sphi 0, %s167
      %s182 = sphi 0, %s168
      %s186 = sphi 0, %s186
      %s188 = sphi 0, %s186
      %s189 = sphi 0, %s188
      %s203 = sphi 0, %s189
      %s207 = sphi 0, %s207
      %s209 = sphi 0, %s207
      %s210 = sphi 0, %s209
      %s224 = sphi 0, %s210
      %s232 = sphi 0, %s234
      %s235 = sphi 0, %s232
      %s236 = sphi 0, %s235
      %s252 = sphi 0, %s236
      %s260 = sphi 0, %s262
      %s263 = sphi 0, %s260
      %s264 = sphi 0, %s263
      %s280 = sphi 0, %s264
    $region4: #{tpu_custom_call.1} parent=1 // loop_header_branch
      %31 = sbr.rel (%p29) target = $region8
    $region5: #{tpu_custom_call.1} parent=1 // loop_body
      %s33 = ssub.s32 %s28, 1
      %s34 = ssub.s32 %s28, 2
      %s41 = sadd.s32 1, %s36
      %p42 = scmp.ge.s32.totalorder %s41, 1
      %s43 = scalar_select %p42, 0, %s41
      %s44 = sadd.s32 1, %s35
      %s45 = scalar_select %p42, %s44, %s35
      %p46 = scmp.ge.s32.totalorder %s45, 2
      %s47 = scalar_select %p46, 0, %s45
      %s48 = ssub.s32 %s35, %s47
      %s49 = ssub.s32 %s36, %s43
      %s50 = sor.u32 %s48, %s49
      %p51 = scmp.eq.s32.totalorder %s50, 0
      %s53 = sadd.s32 %s52, 1
      %s54 = scalar_select %p51, %s52, %s53
      %p57 = pneg %p51
      %p58 = scmp.eq.s32.totalorder %s28, 1
      %p59 = por %p57, %p58
      %p60 = scmp.ne.s32.totalorder %s52, %s55
      %p61 = scmp.eq.s32.totalorder %s28, 0
      %p62 = por %p60, %p61
      %p63 = scmp.ne.s32.totalorder %s52, %s55
      %p64 = scmp.eq.s32.totalorder %s33, 1
      %p65 = por %p63, %p64
      %p66 = scmp.ne.s32.totalorder %s55, %s56
      %p67 = scmp.eq.s32.totalorder %s33, 0
      %p68 = por %p66, %p67
      %p69 = scmp.ne.s32.totalorder %s55, %s56
      %p70 = scmp.eq.s32.totalorder %s34, 1
      %p71 = por %p69, %p70
      %p73 = scmp.ne.s32.totalorder %s56, %s72
      %p74 = scmp.eq.s32.totalorder %s34, 0
      %p75 = por %p73, %p74
      %s76 = ssub.s32 %s36, 1
      %p77 = scmp.gt.s32.totalorder %s76, 0
      %s78 = scalar_select %p77, %s76, 0
      %s79 = ssub.s32 %s43, 1
      %p80 = scmp.gt.s32.totalorder %s79, 0
      %s81 = scalar_select %p80, %s79, 0
      %s82 = ssub.s32 %s35, %s47
      %s83 = ssub.s32 %s78, %s81
      %s84 = sor.u32 %s82, %s83
      %p85 = scmp.eq.s32.totalorder %s84, 0
      %s87 = sadd.s32 %s86, 1
      %s88 = scalar_select %p85, %s86, %s87
      %p91 = pneg %p85
      %p92 = scmp.eq.s32.totalorder %s28, 1
      %p93 = por %p91, %p92
      %p94 = scmp.ne.s32.totalorder %s86, %s89
      %p95 = scmp.eq.s32.totalorder %s28, 0
      %p96 = por %p94, %p95
      %p97 = scmp.ne.s32.totalorder %s86, %s89
      %p98 = scmp.eq.s32.totalorder %s33, 1
      %p99 = por %p97, %p98
      %p100 = scmp.ne.s32.totalorder %s89, %s90
      %p101 = scmp.eq.s32.totalorder %s33, 0
      %p102 = por %p100, %p101
      %p103 = scmp.ne.s32.totalorder %s89, %s90
      %p104 = scmp.eq.s32.totalorder %s34, 1
      %p105 = por %p103, %p104
      %p107 = scmp.ne.s32.totalorder %s90, %s106
      %p108 = scmp.eq.s32.totalorder %s34, 0
      %p109 = por %p107, %p108
      %s110 = sadd.s32 %s36, 1
      %p111 = scmp.lt.s32.totalorder %s110, 0
      %s112 = scalar_select %p111, %s110, 0
      %s113 = sadd.s32 %s43, 1
      %p114 = scmp.lt.s32.totalorder %s113, 0
      %s115 = scalar_select %p114, %s113, 0
      %s116 = ssub.s32 %s35, %s47
      %s117 = ssub.s32 %s112, %s115
      %s118 = sor.u32 %s116, %s117
      %p119 = scmp.eq.s32.totalorder %s118, 0
      %s121 = sadd.s32 %s120, 1
      %s122 = scalar_select %p119, %s120, %s121
      %p125 = pneg %p119
      %p126 = scmp.eq.s32.totalorder %s28, 1
      %p127 = por %p125, %p126
      %p128 = scmp.ne.s32.totalorder %s120, %s123
      %p129 = scmp.eq.s32.totalorder %s28, 0
      %p130 = por %p128, %p129
      %p131 = scmp.ne.s32.totalorder %s120, %s123
      %p132 = scmp.eq.s32.totalorder %s33, 1
      %p133 = por %p131, %p132
      %p134 = scmp.ne.s32.totalorder %s123, %s124
      %p135 = scmp.eq.s32.totalorder %s33, 0
      %p136 = por %p134, %p135
      %p137 = scmp.ne.s32.totalorder %s123, %s124
      %p138 = scmp.eq.s32.totalorder %s34, 1
      %p139 = por %p137, %p138
      %p141 = scmp.ne.s32.totalorder %s124, %s140
      %p142 = scmp.eq.s32.totalorder %s34, 0
      %p143 = por %p141, %p142
      %s145 = sadd.s32 %s144, 1
      %p148 = scmp.eq.s32.totalorder %s28, 1
      %p149 = scmp.ne.s32.totalorder %s144, %s146
      %p150 = scmp.eq.s32.totalorder %s28, 0
      %p151 = por %p149, %p150
      %p152 = scmp.ne.s32.totalorder %s144, %s146
      %p153 = scmp.eq.s32.totalorder %s33, 1
      %p154 = por %p152, %p153
      %p155 = scmp.ne.s32.totalorder %s146, %s147
      %p156 = scmp.eq.s32.totalorder %s33, 0
      %p157 = por %p155, %p156
      %p158 = scmp.ne.s32.totalorder %s146, %s147
      %p159 = scmp.eq.s32.totalorder %s34, 1
      %p160 = por %p158, %p159
      %p162 = scmp.ne.s32.totalorder %s147, %s161
      %p163 = scmp.eq.s32.totalorder %s34, 0
      %p164 = por %p162, %p163
      %s166 = sadd.s32 %s165, 1
      %p169 = scmp.eq.s32.totalorder %s28, 1
      %p170 = scmp.ne.s32.totalorder %s165, %s167
      %p171 = scmp.eq.s32.totalorder %s28, 0
      %p172 = por %p170, %p171
      %p173 = scmp.ne.s32.totalorder %s165, %s167
      %p174 = scmp.eq.s32.totalorder %s33, 1
      %p175 = por %p173, %p174
      %p176 = scmp.ne.s32.totalorder %s167, %s168
      %p177 = scmp.eq.s32.totalorder %s33, 0
      %p178 = por %p176, %p177
      %p179 = scmp.ne.s32.totalorder %s167, %s168
      %p180 = scmp.eq.s32.totalorder %s34, 1
      %p181 = por %p179, %p180
      %p183 = scmp.ne.s32.totalorder %s168, %s182
      %p184 = scmp.eq.s32.totalorder %s34, 0
      %p185 = por %p183, %p184
      %s187 = sadd.s32 %s186, 1
      %p190 = scmp.eq.s32.totalorder %s28, 1
      %p191 = scmp.ne.s32.totalorder %s186, %s188
      %p192 = scmp.eq.s32.totalorder %s28, 0
      %p193 = por %p191, %p192
      %p194 = scmp.ne.s32.totalorder %s186, %s188
      %p195 = scmp.eq.s32.totalorder %s33, 1
      %p196 = por %p194, %p195
      %p197 = scmp.ne.s32.totalorder %s188, %s189
      %p198 = scmp.eq.s32.totalorder %s33, 0
      %p199 = por %p197, %p198
      %p200 = scmp.ne.s32.totalorder %s188, %s189
      %p201 = scmp.eq.s32.totalorder %s34, 1
      %p202 = por %p200, %p201
      %p204 = scmp.ne.s32.totalorder %s189, %s203
      %p205 = scmp.eq.s32.totalorder %s34, 0
      %p206 = por %p204, %p205
      %s208 = sadd.s32 %s207, 1
      %p211 = scmp.eq.s32.totalorder %s28, 1
      %p212 = scmp.ne.s32.totalorder %s207, %s209
      %p213 = scmp.eq.s32.totalorder %s28, 0
      %p214 = por %p212, %p213
      %p215 = scmp.ne.s32.totalorder %s207, %s209
      %p216 = scmp.eq.s32.totalorder %s33, 1
      %p217 = por %p215, %p216
      %p218 = scmp.ne.s32.totalorder %s209, %s210
      %p219 = scmp.eq.s32.totalorder %s33, 0
      %p220 = por %p218, %p219
      %p221 = scmp.ne.s32.totalorder %s209, %s210
      %p222 = scmp.eq.s32.totalorder %s34, 1
      %p223 = por %p221, %p222
      %p225 = scmp.ne.s32.totalorder %s210, %s224
      %p226 = scmp.eq.s32.totalorder %s34, 0
      %p227 = por %p225, %p226
      %s228 = ssub.s32 %s35, %s47
      %s229 = ssub.s32 %s36, %s43
      %s230 = sor.u32 %s228, %s229
      %p231 = scmp.eq.s32.totalorder %s230, 0
      %s233 = sadd.s32 %s232, 1
      %s234 = scalar_select %p231, %s232, %s233
      %p237 = pneg %p231
      %p238 = scmp.eq.s32.totalorder %s28, 1
      %p239 = por %p237, %p238
      %p240 = scmp.ne.s32.totalorder %s232, %s235
      %p241 = scmp.eq.s32.totalorder %s28, 0
      %p242 = por %p240, %p241
      %p243 = scmp.ne.s32.totalorder %s232, %s235
      %p244 = scmp.eq.s32.totalorder %s33, 1
      %p245 = por %p243, %p244
      %p246 = scmp.ne.s32.totalorder %s235, %s236
      %p247 = scmp.eq.s32.totalorder %s33, 0
      %p248 = por %p246, %p247
      %p249 = scmp.ne.s32.totalorder %s235, %s236
      %p250 = scmp.eq.s32.totalorder %s34, 1
      %p251 = por %p249, %p250
      %p253 = scmp.ne.s32.totalorder %s236, %s252
      %p254 = scmp.eq.s32.totalorder %s34, 0
      %p255 = por %p253, %p254
      %s256 = ssub.s32 %s35, %s47
      %s257 = ssub.s32 %s36, %s43
      %s258 = sor.u32 %s256, %s257
      %p259 = scmp.eq.s32.totalorder %s258, 0
      %s261 = sadd.s32 %s260, 1
      %s262 = scalar_select %p259, %s260, %s261
      %p265 = pneg %p259
      %p266 = scmp.eq.s32.totalorder %s28, 1
      %p267 = por %p265, %p266
      %p268 = scmp.ne.s32.totalorder %s260, %s263
      %p269 = scmp.eq.s32.totalorder %s28, 0
      %p270 = por %p268, %p269
      %p271 = scmp.ne.s32.totalorder %s260, %s263
      %p272 = scmp.eq.s32.totalorder %s33, 1
      %p273 = por %p271, %p272
      %p274 = scmp.ne.s32.totalorder %s263, %s264
      %p275 = scmp.eq.s32.totalorder %s33, 0
      %p276 = por %p274, %p275
      %p277 = scmp.ne.s32.totalorder %s263, %s264
      %p278 = scmp.eq.s32.totalorder %s34, 1
      %p279 = por %p277, %p278
      %p281 = scmp.ne.s32.totalorder %s264, %s280
      %p282 = scmp.eq.s32.totalorder %s34, 0
      %p283 = por %p281, %p282
      %p284 = scmp.le.s32.totalorder 1, %s28
      %p285 = scmp.lt.s32.totalorder %s28, 3
      %p286 = pnand %p284, %p285
      %p287 = pneg %p286
      // Predicated region
      $region9: #{tpu_custom_call.1} parent=5 // pred_check
        _
      $region10: #{tpu_custom_call.1} parent=5 // pred_check_branch
        %289 = sbr.rel (%p286) target = $region12
      $region11: #{tpu_custom_call.1} parent=5 // pred_region
        %s290 = ssub.s32 %s28, 1
        // Predicated region
        $region13: #{tpu_custom_call.1} parent=11 // pred_check
          %p291 = pneg %p157
        $region14: #{tpu_custom_call.1} parent=11 // pred_check_branch
          %293 = sbr.rel (%p291) target = $region16
        $region15: #{tpu_custom_call.1} parent=11 // pred_region
          %s295 = ssub.s32 768, 768
          %296 = vsyncadd [#allocation9], %s295
          %s297 = sshll.u32 [#allocation8], 4
          %s298 = int_to_ptr.vmem [resolvable:$true] %s297
          %303 = dma.hbm_to_vmem [thread:$0]  %s3, 768, %s298, [#allocation9], 128, 128, 8
        $region16: #{tpu_custom_call.1} parent=11 // pred_fallthru
          _
        // Predicated region
        $region17: #{tpu_custom_call.1} parent=11 // pred_check
          %p304 = pneg %p178
        $region18: #{tpu_custom_call.1} parent=11 // pred_check_branch
          %306 = sbr.rel (%p304) target = $region20
        $region19: #{tpu_custom_call.1} parent=11 // pred_region
          _
        $region20: #{tpu_custom_call.1} parent=11 // pred_fallthru
          _
        // Predicated region
        $region21: #{tpu_custom_call.1} parent=11 // pred_check
          %p307 = pneg %p199
        $region22: #{tpu_custom_call.1} parent=11 // pred_check_branch
          %309 = sbr.rel (%p307) target = $region24
        $region23: #{tpu_custom_call.1} parent=11 // pred_region
          _
        $region24: #{tpu_custom_call.1} parent=11 // pred_fallthru
          _
        // Predicated region
        $region25: #{tpu_custom_call.1} parent=11 // pred_check
          %p310 = pneg %p220
        $region26: #{tpu_custom_call.1} parent=11 // pred_check_branch
          %312 = sbr.rel (%p310) target = $region28
        $region27: #{tpu_custom_call.1} parent=11 // pred_region
          _
        $region28: #{tpu_custom_call.1} parent=11 // pred_fallthru
          _
      $region12: #{tpu_custom_call.1} parent=5 // pred_fallthru
        _
      %p313 = scmp.lt.s32.totalorder %s28, 2
      // Predicated region
      $region29: #{tpu_custom_call.1} parent=5 // pred_check
        %p314 = pneg %p313
      $region30: #{tpu_custom_call.1} parent=5 // pred_check_branch
        %316 = sbr.rel (%p314) target = $region32
      $region31: #{tpu_custom_call.1} parent=5 // pred_region
        // Predicated region
        $region33: #{tpu_custom_call.1} parent=31 // pred_check
          %p317 = pneg %p62
        $region34: #{tpu_custom_call.1} parent=31 // pred_check_branch
          %319 = sbr.rel (%p317) target = $region36
        $region35: #{tpu_custom_call.1} parent=31 // pred_region
          %s320 = sand.u32 %s52, 1
          %s321 = scalar_lea.sflag [#allocation3], %s320
          %s322 = sand.u32 %s52, 1
          %s323 = smul.addr %s322, 8
          %s324 = scalar_lea.vmem [#allocation2], %s323
          %s326 = ssub.s32 128, 128
          %327 = vsyncadd %s321, %s326
          %s328 = sadd.s32 %s36, %s35
          %s329 = smul.addr %s328, 128
          %s330 = scalar_lea.hbm %s0, %s329
          %s332 = sshll.u32 %s324, 4
          %s333 = int_to_ptr.vmem [resolvable:$true] %s332
          %335 = dma.hbm_to_vmem [thread:$0]  %s330, 128, %s333, %s321
        $region36: #{tpu_custom_call.1} parent=31 // pred_fallthru
          _
        // Predicated region
        $region37: #{tpu_custom_call.1} parent=31 // pred_check
          %p336 = pneg %p96
        $region38: #{tpu_custom_call.1} parent=31 // pred_check_branch
          %338 = sbr.rel (%p336) target = $region40
        $region39: #{tpu_custom_call.1} parent=31 // pred_region
          %s339 = sand.u32 %s28, 1
          %s340 = scalar_lea.sflag [#allocation6], %s339
          %s341 = sand.u32 %s86, 1
          %s342 = smul.addr %s341, 8
          %s343 = scalar_lea.vmem [#allocation5], %s342
          %s344 = ssub.s32 %s36, 1
          %p345 = scmp.gt.s32.totalorder %s344, 0
          %s346 = scalar_select %p345, %s344, 0
          %s348 = ssub.s32 128, 128
          %349 = vsyncadd %s340, %s348
          %s350 = sadd.s32 %s346, %s35
          %s351 = smul.addr %s350, 128
          %s352 = scalar_lea.hbm %s1, %s351
          %s354 = sshll.u32 %s343, 4
          %s355 = int_to_ptr.vmem [resolvable:$true] %s354
          %357 = dma.hbm_to_vmem [thread:$0]  %s352, 128, %s355, %s340
        $region40: #{tpu_custom_call.1} parent=31 // pred_fallthru
          _
        // Predicated region
        $region41: #{tpu_custom_call.1} parent=31 // pred_check
          %p358 = pneg %p130
        $region42: #{tpu_custom_call.1} parent=31 // pred_check_branch
          %360 = sbr.rel (%p358) target = $region44
        $region43: #{tpu_custom_call.1} parent=31 // pred_region
          %s361 = sand.u32 %s28, 1
          %s362 = scalar_lea.sflag [#allocation6], %s361
          %s363 = sand.u32 %s120, 1
          %s364 = smul.addr %s363, 8
          %s365 = scalar_lea.vmem [#allocation7], %s364
          %s366 = sadd.s32 %s36, 1
          %p367 = scmp.lt.s32.totalorder %s366, 0
          %s368 = scalar_select %p367, %s366, 0
          %s370 = ssub.s32 128, 128
          %371 = vsyncadd %s362, %s370
          %s372 = sadd.s32 %s368, %s35
          %s373 = smul.addr %s372, 128
          %s374 = scalar_lea.hbm %s2, %s373
          %s376 = sshll.u32 %s365, 4
          %s377 = int_to_ptr.vmem [resolvable:$true] %s376
          %379 = dma.hbm_to_vmem [thread:$0]  %s374, 128, %s377, %s362
        $region44: #{tpu_custom_call.1} parent=31 // pred_fallthru
          _
      $region32: #{tpu_custom_call.1} parent=5 // pred_fallthru
        _
      %p380 = scmp.le.s32.totalorder 1, %s28
      %p381 = scmp.lt.s32.totalorder %s28, 3
      %p382 = pnand %p380, %p381
      %p383 = pneg %p382
      // Predicated region
      $region45: #{tpu_custom_call.1} parent=5 // pred_check
        _
      $region46: #{tpu_custom_call.1} parent=5 // pred_check_branch
        %385 = sbr.rel (%p382) target = $region48
      $region47: #{tpu_custom_call.1} parent=5 // pred_region
        %s386 = ssub.s32 %s28, 1
        %s387 = sand.u32 %s55, 1
        %s388 = scalar_lea.sflag [#allocation3], %s387
        %s389 = sand.u32 %s55, 1
        %s390 = smul.addr %s389, 8
        %s391 = scalar_lea.vmem [#allocation2], %s390
        // Predicated region
        $region49: #{tpu_custom_call.1} parent=47 // pred_check
          %p392 = pneg %p68
        $region50: #{tpu_custom_call.1} parent=47 // pred_check_branch
          %394 = sbr.rel (%p392) target = $region52
        $region51: #{tpu_custom_call.1} parent=47 // pred_region
          %395 = dma.done %s388, 128
        $region52: #{tpu_custom_call.1} parent=47 // pred_fallthru
          _
        %s396 = sand.u32 %s33, 1
        %s397 = scalar_lea.sflag [#allocation6], %s396
        %s398 = sand.u32 %s89, 1
        %s399 = smul.addr %s398, 8
        %s400 = scalar_lea.vmem [#allocation5], %s399
        // Predicated region
        $region53: #{tpu_custom_call.1} parent=47 // pred_check
          %p401 = pneg %p102
        $region54: #{tpu_custom_call.1} parent=47 // pred_check_branch
          %403 = sbr.rel (%p401) target = $region56
        $region55: #{tpu_custom_call.1} parent=47 // pred_region
          %404 = dma.done %s397, 128
        $region56: #{tpu_custom_call.1} parent=47 // pred_fallthru
          _
        %s405 = sand.u32 %s33, 1
        %s406 = scalar_lea.sflag [#allocation6], %s405
        %s407 = sand.u32 %s123, 1
        %s408 = smul.addr %s407, 8
        %s409 = scalar_lea.vmem [#allocation7], %s408
        // Predicated region
        $region57: #{tpu_custom_call.1} parent=47 // pred_check
          %p410 = pneg %p136
        $region58: #{tpu_custom_call.1} parent=47 // pred_check_branch
          %412 = sbr.rel (%p410) target = $region60
        $region59: #{tpu_custom_call.1} parent=47 // pred_region
          %413 = dma.done %s406, 128
        $region60: #{tpu_custom_call.1} parent=47 // pred_fallthru
          _
        // Predicated region
        $region61: #{tpu_custom_call.1} parent=47 // pred_check
          %p414 = pneg %p157
        $region62: #{tpu_custom_call.1} parent=47 // pred_check_branch
          %416 = sbr.rel (%p414) target = $region64
        $region63: #{tpu_custom_call.1} parent=47 // pred_region
          %417 = dma.done [#allocation9], 768
        $region64: #{tpu_custom_call.1} parent=47 // pred_fallthru
          _
        %s418 = sand.u32 %s55, 1
        %s419 = scalar_lea.sflag [#allocation3], %s418
        %s420 = sand.u32 %s55, 1
        %s421 = smul.addr %s420, 8
        %s422 = scalar_lea.vmem [#allocation2], %s421
        %p423 = pneg %p68
        %p424 = pneg %p65
        %s425 = sand.u32 %s33, 1
        %s426 = scalar_lea.sflag [#allocation6], %s425
        %s427 = sand.u32 %s89, 1
        %s428 = smul.addr %s427, 8
        %s429 = scalar_lea.vmem [#allocation5], %s428
        %p430 = pneg %p102
        %p431 = pneg %p99
        %s432 = sand.u32 %s33, 1
        %s433 = scalar_lea.sflag [#allocation6], %s432
        %s434 = sand.u32 %s123, 1
        %s435 = smul.addr %s434, 8
        %s436 = scalar_lea.vmem [#allocation7], %s435
        %p437 = pneg %p136
        %p438 = pneg %p133
        %p439 = pneg %p157
        %p440 = pneg %p154
        %p441 = pneg %p178
        %p442 = pneg %p175
        %p443 = pneg %p199
        %p444 = pneg %p196
        %p445 = pneg %p220
        %p446 = pneg %p217
        %p447 = pneg %p248
        %p448 = pneg %p245
        %s449 = sand.u32 %s235, 1
        %s450 = scalar_lea.sflag [#allocation4], %s449
        %s451 = sand.u32 %s235, 1
        %s452 = smul.addr %s451, 8
        %s453 = scalar_lea.vmem [#allocation10], %s452
        %p454 = pneg %p276
        %p455 = pneg %p273
        %s456 = sand.u32 %s263, 1
        %s457 = scalar_lea.sflag [#allocation12], %s456
        %s458 = sand.u32 %s263, 1
        %s459 = smul.addr %s458, 2
        %s460 = scalar_lea.vmem [#allocation11], %s459
        %s461 = ssub.s32 %s38, 1
        %p462 = scmp.gt.s32.totalorder %s461, 0
        %s463 = scalar_select %p462, %s461, 0
        %s464 = sadd.s32 %s38, 1
        %p465 = scmp.lt.s32.totalorder %s464, 0
        %s466 = scalar_select %p465, %s464, 0
        %v467 = vld [vmem:[%s391] sm:$0xff]
        %v468 = vld [vmem:[%s400 + $0x7] sm:$0x1]
        %v469 = vld [vmem:[%s409] sm:$0x1]
        %p470 = scmp.gt.s32.totalorder %s38, 0
        %s471 = scalar_select %p470, 1, 0
        %s472 = scvt.s32.f32 %s471
        %v473 = vstv %s472
        %v474 = vmul.f32 %v468, %v473
        %p475 = scmp.lt.s32.totalorder %s38, 0
        %s476 = scalar_select %p475, 1, 0
        %s477 = scvt.s32.f32 %s476
        %v478 = vstv %s477
        %v479 = vmul.f32 %v469, %v478
        %v481 = vrot.slane %v467, 7
        %vm483 = vcmask 1040384
        %v484 = vsel %vm483, %v474, %v481
        %v485 = vrot.slane %v467, 1
        %v488 = vrot.slane %v479, 1
        %vm490 = vcmask 1046528
        %v491 = vsel %vm490, %v485, %v488
        %492 = vrot.lane.b32.xlu0 %v467, 16
        %v493 = vpop.permute.xlu0 %492
        %496 = vrot.lane.b32.xlu0 %v491, 32
        %v497 = vpop.permute.xlu0 %496
        %vm499 = vcmask 130048
        %v500 = vsel %vm499, %v484, %v493
        %vm501 = vcmask 261120
        %v502 = vsel %vm501, %v500, %v497
        %v503 = vld [vmem:[#allocation8] sm:$0xff]
        %v504 = vld [vmem:[#allocation8 + $0x8] sm:$0xff]
        %v505 = vld [vmem:[#allocation8 + $0x10] sm:$0xff]
        %v506 = vld [vmem:[#allocation8 + $0x18] sm:$0xff]
        %v507 = vld [vmem:[#allocation8 + $0x20] sm:$0xff]
        %v508 = vld [vmem:[#allocation8 + $0x28] sm:$0xff]
        %v509 = vld [vmem:[%s4] sm:$0x1]
        %v511 = vlaneseq
        %v512 = vshrl.u32 %v511, 7
        %v513 = vsub.s32 0, %v512
        %v514 = vrot.slane %v509, %v513
        %vm516 = vcmask 392192
        %v518 = vsel %vm516, %v502, 0
        %520 = vmatprep.subr.mxu0 0.0
        %521 = vmatpush1.msra.mxu0 0.0
        %522 = vmatprep.subr.mxu0 0.0
        %523 = vmatpush1.msra.mxu0 0.0
        %524 = vmatprep.subr.mxu0 0.0
        %525 = vmatpush1.msra.mxu0 0.0
        %526 = vmatprep.subr.mxu0 0.0
        %527 = vmatpush1.msra.mxu0 0.0
        %528 = vmatprep.subr.mxu0 0.0
        %529 = vmatpush1.msra.mxu0 0.0
        %530 = vmatprep.subr.mxu0 0.0
        %531 = vmatpush1.msra.mxu0 0.0
        %532 = vmatprep.subr.mxu0 0.0
        %533 = vmatpush1.msra.mxu0 0.0
        %534 = vmatprep.subr.mxu0 0.0
        %535 = vmatpush1.msra.mxu0 0.0
        %536 = vmatprep.subr.mxu0 0.0
        %537 = vmatpush1.msra.mxu0 0.0
        %538 = vmatprep.subr.mxu0 0.0
        %539 = vmatpush1.msra.mxu0 0.0
        %540 = vmatprep.subr.mxu0 0.0
        %541 = vmatpush1.msra.mxu0 %v508
        %542 = vmatprep.subr.mxu0 0.0
        %543 = vmatpush1.msra.mxu0 %v507
        %544 = vmatprep.subr.mxu0 0.0
        %545 = vmatpush1.msra.mxu0 %v506
        %546 = vmatprep.subr.mxu0 0.0
        %547 = vmatpush1.msra.mxu0 %v505
        %548 = vmatprep.subr.mxu0 0.0
        %549 = vmatpush1.msra.mxu0 %v504
        %550 = vmatprep.subr.mxu0 0.0
        %551 = vmatpush1.msra.mxu0 %v503
        %552 = vmatprep.subr.mxu0 0.0
        %553 = vmatpush2.msra.mxu0 0.0
        %554 = vmatprep.subr.mxu0 0.0
        %555 = vmatpush2.msra.mxu0 0.0
        %556 = vmatprep.subr.mxu0 0.0
        %557 = vmatpush2.msra.mxu0 0.0
        %558 = vmatprep.subr.mxu0 0.0
        %559 = vmatpush2.msra.mxu0 0.0
        %560 = vmatprep.subr.mxu0 0.0
        %561 = vmatpush2.msra.mxu0 0.0
        %562 = vmatprep.subr.mxu0 0.0
        %563 = vmatpush2.msra.mxu0 0.0
        %564 = vmatprep.subr.mxu0 0.0
        %565 = vmatpush2.msra.mxu0 0.0
        %566 = vmatprep.subr.mxu0 0.0
        %567 = vmatpush2.msra.mxu0 0.0
        %568 = vmatprep.subr.mxu0 0.0
        %569 = vmatpush2.msra.mxu0 0.0
        %570 = vmatprep.subr.mxu0 0.0
        %571 = vmatpush2.msra.mxu0 0.0
        %572 = vmatprep.subr.mxu0 0.0
        %573 = vmatpush2.msra.mxu0 0.0
        %574 = vmatprep.subr.mxu0 0.0
        %575 = vmatpush2.msra.mxu0 0.0
        %576 = vmatprep.subr.mxu0 0.0
        %577 = vmatpush2.msra.mxu0 0.0
        %578 = vmatprep.subr.mxu0 0.0
        %579 = vmatpush2.msra.mxu0 0.0
        %580 = vmatprep.subr.mxu0 0.0
        %581 = vmatpush2.msra.mxu0 0.0
        %582 = vmatprep.subr.mxu0 0.0
        %583 = vmatpush2.msra.mxu0 0.0
        %584 = vmatprep.mubr.f32.mxu0 0.0
        %585 = vmatmul.mubr.f32.gmra.mxu0 %v518
        %v586 = vpop.f32.mrf.mxu0
        %v587 = vadd.f32 %v514, %v586
        %v588 = vpop.f32.mrf.mxu0
        %589 = vdwg.mxu0
        %vm590 = vcmask 523264
        %591 = vst.msk [vmem:[%s453] sm:$0xff] %vm590, %v587
        %v592 = vsel %vm590, %v587, 0.0
        %v593 = vrot.slane %v592, 4
        %v594 = vadd.f32 %v592, %v593
        %v595 = vrot.slane %v594, 2
        %v596 = vadd.f32 %v594, %v595
        %v597 = vrot.slane %v596, 1
        %v598 = vadd.f32 %v596, %v597
        %vm599 = vcmask 516096
        %600 = vst.msk [vmem:[%s460] sm:$0x1] %vm599, %v598
        %v601 = vmul.f32 %v587, %v587
        %v602 = vsel %vm590, %v601, 0.0
        %v603 = vrot.slane %v602, 4
        %v604 = vadd.f32 %v602, %v603
        %v605 = vrot.slane %v604, 2
        %v606 = vadd.f32 %v604, %v605
        %v607 = vrot.slane %v606, 1
        %v608 = vadd.f32 %v606, %v607
        %609 = vst.msk [vmem:[%s460 + $0x1] sm:$0x1] %vm599, %v608
        %s610 = sand.u32 %s235, 1
        %s611 = scalar_lea.sflag [#allocation4], %s610
        %s612 = sand.u32 %s235, 1
        %s613 = smul.addr %s612, 8
        %s614 = scalar_lea.vmem [#allocation10], %s613
        %s615 = sand.u32 %s263, 1
        %s616 = scalar_lea.sflag [#allocation12], %s615
        %s617 = sand.u32 %s263, 1
        %s618 = smul.addr %s617, 2
        %s619 = scalar_lea.vmem [#allocation11], %s618
        // Predicated region
        $region65: #{tpu_custom_call.1} parent=47 // pred_check
          %p620 = pneg %p245
        $region66: #{tpu_custom_call.1} parent=47 // pred_check_branch
          %622 = sbr.rel (%p620) target = $region68
        $region67: #{tpu_custom_call.1} parent=47 // pred_region
          %s624 = ssub.s32 128, 128
          %625 = vsyncadd %s611, %s624
          %s626 = sadd.s32 %s38, %s37
          %s627 = smul.addr %s626, 128
          %s628 = scalar_lea.hbm %s7, %s627
          %s630 = sshll.u32 %s614, 4
          %s631 = int_to_ptr.vmem [resolvable:$true] %s630
          %633 = dma.vmem_to_hbm [thread:$0]  %s631, 128, %s628, %s611
        $region68: #{tpu_custom_call.1} parent=47 // pred_fallthru
          _
        // Predicated region
        $region69: #{tpu_custom_call.1} parent=47 // pred_check
          %p634 = pneg %p273
        $region70: #{tpu_custom_call.1} parent=47 // pred_check_branch
          %636 = sbr.rel (%p634) target = $region72
        $region71: #{tpu_custom_call.1} parent=47 // pred_region
          %s638 = ssub.s32 32, 32
          %639 = vsyncadd %s616, %s638
          %s640 = sadd.s32 %s38, %s37
          %s641 = smul.addr %s640, 32
          %s642 = scalar_lea.hbm %s8, %s641
          %s644 = sshll.u32 %s619, 4
          %s645 = int_to_ptr.vmem [resolvable:$true] %s644
          %647 = dma.vmem_to_hbm [thread:$0]  %s645, 32, %s642, %s616
        $region72: #{tpu_custom_call.1} parent=47 // pred_fallthru
          _
      $region48: #{tpu_custom_call.1} parent=5 // pred_fallthru
        _
      %p648 = scmp.le.s32.totalorder 2, %s28
      // Predicated region
      $region73: #{tpu_custom_call.1} parent=5 // pred_check
        %p649 = pneg %p648
      $region74: #{tpu_custom_call.1} parent=5 // pred_check_branch
        %651 = sbr.rel (%p649) target = $region76
      $region75: #{tpu_custom_call.1} parent=5 // pred_region
        %s652 = ssub.s32 %s28, 2
        // Predicated region
        $region77: #{tpu_custom_call.1} parent=75 // pred_check
          %p653 = pneg %p251
        $region78: #{tpu_custom_call.1} parent=75 // pred_check_branch
          %655 = sbr.rel (%p653) target = $region80
        $region79: #{tpu_custom_call.1} parent=75 // pred_region
          %s656 = sand.u32 %s236, 1
          %s657 = scalar_lea.sflag [#allocation4], %s656
          %s658 = sand.u32 %s236, 1
          %s659 = smul.addr %s658, 8
          %s660 = scalar_lea.vmem [#allocation10], %s659
          %661 = dma.done %s657, 128
        $region80: #{tpu_custom_call.1} parent=75 // pred_fallthru
          _
        // Predicated region
        $region81: #{tpu_custom_call.1} parent=75 // pred_check
          %p662 = pneg %p279
        $region82: #{tpu_custom_call.1} parent=75 // pred_check_branch
          %664 = sbr.rel (%p662) target = $region84
        $region83: #{tpu_custom_call.1} parent=75 // pred_region
          %s665 = sand.u32 %s264, 1
          %s666 = scalar_lea.sflag [#allocation12], %s665
          %s667 = sand.u32 %s264, 1
          %s668 = smul.addr %s667, 2
          %s669 = scalar_lea.vmem [#allocation11], %s668
          %670 = dma.done %s666, 32
        $region84: #{tpu_custom_call.1} parent=75 // pred_fallthru
          _
      $region76: #{tpu_custom_call.1} parent=5 // pred_fallthru
        _
    $region6: #{tpu_custom_call.1} parent=1 // loop_footer
      %s32 = sadd.s32 1, %s28
    $region7: #{tpu_custom_call.1} parent=1 // loop_footer_branch
      %27 = sbr.rel target = $region3
    $region8: #{tpu_custom_call.1} parent=1 // loop_exit
      _
    %671 = vsyncpa [#allocation3], 1
    %s672 = scalar_lea.sflag [#allocation3], 1
    %673 = vsyncpa %s672, 1
    %674 = vsyncpa [#allocation6], 1
    %s675 = scalar_lea.sflag [#allocation6], 1
    %676 = vsyncpa %s675, 1
    %677 = vsyncpa [#allocation9], 1
    %678 = vsyncpa [#allocation4], 1
    %s679 = scalar_lea.sflag [#allocation4], 1
    %680 = vsyncpa %s679, 1
    %681 = vsyncpa [#allocation12], 1
    %s682 = scalar_lea.sflag [#allocation12], 1
    %683 = vsyncpa %s682, 1

</llo_original>
